<compile_context>
chip_gen: v6e
topology: v6e:2x2x1
jax: 0.10.0
libtpu: 0.0.40
codegen_flags: <defaults>
</compile_context>

<pallas_src>
import numpy as np
import jax
import jax.numpy as jnp
from jax import lax
from jax.experimental import pallas as pl
from jax.experimental.pallas import tpu as pltpu


_VMEM_BUDGET = 24 * 1024 * 1024   # target bytes of pipelined blocks (safe on v5e/v6e/v7x)
_VMEM_LIMIT = 48 * 1024 * 1024    # scoped VMEM limit handed to Mosaic


# ----------------------------------------------------------------------------
# Kernel: one (batch, row-tile) slab of one modality segment.
#   de_ref    : (tq, Npad)   compute dtype  — edge rows of this tile
#   fnk_ref   : (Npad, Cin)  compute dtype  — full segment features (keys)
#   w_feat/raw: (Cin, C)     f32            — Linear weights, (in, out) layout
#   vec_ref   : (8, C)       f32            — [b_feat, b_raw, wb1', wb2', ln_g, ln_b, bb, 0]
#   out_ref   : (tq, C)      f32
# ----------------------------------------------------------------------------
def _d2f_agg_kernel(de_ref, fnk_ref, w_feat_ref, w_raw_ref, vec_ref, out_ref):
    tile = pl.program_id(1)
    tq, npad = de_ref.shape

    de = de_ref[...]                                            # (tq, Npad)

    # Zero the segment diagonal without materializing an eye matrix.
    base = tile * tq
    row = lax.broadcasted_iota(jnp.int32, (tq, npad), 0) + base
    col = lax.broadcasted_iota(jnp.int32, (tq, npad), 1)
    de = jnp.where(row == col, jnp.array(0, de.dtype), de)

    # F.normalize(p=1) denominators (f32 accumulation); the normalization itself
    # is applied after the matmul so the scaled slab is never materialized.
    denom = jnp.maximum(
        jnp.sum(jnp.abs(de), axis=-1, keepdims=True, dtype=jnp.float32), 1e-12)

    fn_keys = fnk_ref[...]                                      # (Npad, Cin)
    start = pl.multiple_of(base, tq)
    fn_rows = fnk_ref[pl.ds(start, tq), :]                      # reuse resident keys

    w_feat = w_feat_ref[...]
    w_raw = w_raw_ref[...]
    vec = vec_ref[...]
    b_feat, b_raw = vec[0:1, :], vec[1:2, :]
    wb1, wb2 = vec[2:3, :], vec[3:4, :]
    ln_g, ln_b = vec[4:5, :], vec[5:6, :]
    bb = vec[6:7, 0:1]

    # Aggregation: (tq, Npad) @ (Npad, Cin) on the MXU (f32 accumulation), then
    # row-scale by 1/denom (scaling commutes with the contraction).
    aggr_pre = jnp.dot(de, fn_keys, preferred_element_type=jnp.float32)
    aggr_pre = aggr_pre * pl.reciprocal(denom, approx=False)

    aggr = jnp.dot(aggr_pre, w_raw, preferred_element_type=jnp.float32) + b_raw
    feat = jnp.dot(fn_rows.astype(jnp.float32), w_feat,
                   preferred_element_type=jnp.float32) + b_feat

    # node_beta = sigmoid([feat, aggr, feat-aggr] @ w_beta + b), concat-free with
    # wb3 folded host-side: feat.(wb1+wb3) + aggr.(wb2-wb3) + b.
    logit = jnp.sum(feat * wb1 + aggr * wb2, axis=-1, keepdims=True) + bb
    beta = jax.nn.sigmoid(logit)                                # (tq, 1)
    mix = feat * beta + aggr * (1.0 - beta)

    # LayerNorm (eps=1e-5, biased variance) + ReLU.
    mean = jnp.mean(mix, axis=-1, keepdims=True)
    cent = mix - mean
    var = jnp.mean(cent * cent, axis=-1, keepdims=True)
    y = cent * lax.rsqrt(var + 1e-5) * ln_g + ln_b
    out_ref[...] = jnp.maximum(y, 0.0).astype(out_ref.dtype)


# ----------------------------------------------------------------------------
# Tiling: pad segment node dim, choose row tile under a VMEM byte budget.
# ----------------------------------------------------------------------------
def _choose_tiling(nseg, cin, c, ebytes, budget):
    granule = 128 if nseg >= 128 else 8      # lane-dense edge DMA for big segments
    nseg_pad = ((nseg + granule - 1) // granule) * granule

    def blocks_bytes(tq):
        edge = 2 * tq * nseg_pad * ebytes    # edge rows, double-buffered
        keys = 2 * nseg_pad * cin * ebytes   # resident keys (conservative x2)
        outb = 2 * tq * c * 4                # f32 output block
        live = tq * nseg_pad * ebytes        # masked-slab temporary
        wts = 2 * (2 * cin * c + 8 * c) * 4  # projection weights + packed vectors
        return edge + keys + outb + live + wts

    if blocks_bytes(nseg_pad) <= budget:
        return nseg_pad, nseg_pad            # whole segment in one row tile
    for cand in (2048, 1024, 512, 256, 128, 64, 32, 16, 8):
        if cand < nseg_pad and nseg_pad % cand == 0 and blocks_bytes(cand) <= budget:
            return nseg_pad, cand
    return nseg_pad, 8                       # nseg_pad is always a multiple of 8


# ----------------------------------------------------------------------------
# One modality segment -> pallas_call.
# ----------------------------------------------------------------------------
def _d2f_agg_modal(de_seg, fn_seg, p, compute_dtype, vmem_budget):
    B, nseg, _ = de_seg.shape
    cin = fn_seg.shape[-1]
    c = p["w_feat"].shape[-1]
    ebytes = jnp.dtype(compute_dtype).itemsize

    nseg_pad, tq = _choose_tiling(nseg, cin, c, ebytes, vmem_budget)
    n_tiles = nseg_pad // tq

    de_seg = de_seg.astype(compute_dtype)
    fn_seg = fn_seg.astype(compute_dtype)
    if nseg_pad != nseg:
        pad = nseg_pad - nseg
        # Zero rows/cols contribute nothing to the L1 sums or the matmul.
        de_seg = jnp.pad(de_seg, ((0, 0), (0, pad), (0, pad)))
        fn_seg = jnp.pad(fn_seg, ((0, 0), (0, pad), (0, 0)))

    # Fold wb3 into wb1/wb2 and pack the per-channel vectors into one (8, C) slab.
    wb = p["w_beta"]
    wb1 = wb[0:c, 0] + wb[2 * c:3 * c, 0]
    wb2 = wb[c:2 * c, 0] - wb[2 * c:3 * c, 0]
    vec = jnp.stack(
        [p["b_feat"], p["b_raw"], wb1, wb2, p["ln_gamma"], p["ln_beta"],
         jnp.broadcast_to(p["b_beta"], (c,)), jnp.zeros((c,), jnp.float32)],
        axis=0).astype(jnp.float32)

    const = lambda b, t: (0, 0)

    out = pl.pallas_call(
        _d2f_agg_kernel,
        out_shape=jax.ShapeDtypeStruct((B, nseg_pad, c), jnp.float32),
        grid_spec=pltpu.PrefetchScalarGridSpec(
            num_scalar_prefetch=0,
            grid=(B, n_tiles),
            in_specs=[
                pl.BlockSpec((None, tq, nseg_pad), lambda b, t: (b, t, 0)),    # edge rows
                pl.BlockSpec((None, nseg_pad, cin), lambda b, t: (b, 0, 0)),   # feature keys
                pl.BlockSpec((cin, c), const),                                 # w_feat
                pl.BlockSpec((cin, c), const),                                 # w_raw
                pl.BlockSpec((8, c), const),                                   # packed vectors
            ],
            out_specs=pl.BlockSpec((None, tq, c), lambda b, t: (b, t, 0)),
        ),
        compiler_params=pltpu.CompilerParams(
            dimension_semantics=("parallel", "parallel"),
            vmem_limit_bytes=_VMEM_LIMIT,
        ),
    )(de_seg, fn_seg, p["w_feat"], p["w_raw"], vec)

    return out[:, :nseg, :] if nseg_pad != nseg else out


# ----------------------------------------------------------------------------
# Full module forward.
# ----------------------------------------------------------------------------
def d2f_agg(distribution_edge, feature_node, modal_id, params,
            compute_dtype=jnp.bfloat16, vmem_budget=_VMEM_BUDGET):
    """D2FAgg.forward: returns (B, N, base_c) node features.

    Per-modality segment boundaries come from nonzero(modal_id[0]==i)[first/last]
    (same contiguous-range semantics as the PyTorch reference's start:end slice);
    shapes are data-dependent, so they are resolved host-side — this wrapper is
    not jit-able over modal_id.
    """
    mid = np.asarray(modal_id)[0]
    outs = []
    for i in range(3):
        idxs = np.nonzero(mid == i)[0]
        start, end = int(idxs[0]), int(idxs[-1]) + 1
        de_seg = distribution_edge[:, start:end, start:end]
        fn_seg = feature_node[:, start:end, :]
        outs.append(_d2f_agg_modal(de_seg, fn_seg, params[i], compute_dtype, vmem_budget))
    return jnp.concatenate(outs, axis=1)


# ----------------------------------------------------------------------------
# Pure-JAX reference (mirrors the PyTorch module) for validation.
# ----------------------------------------------------------------------------
def _d2f_agg_ref(de, fn, modal_id, params):
    hi = lax.Precision.HIGHEST
    mid = np.asarray(modal_id)[0]
    outs = []
    for i in range(3):
        idxs = np.nonzero(mid == i)[0]
        s, e = int(idxs[0]), int(idxs[-1]) + 1
        p = params[i]
        sde = de[:, s:e, s:e]
        n = e - s
        eye = jnp.eye(n, dtype=de.dtype)[None]
        masked = sde * (1.0 - eye)
        denom = jnp.maximum(jnp.sum(jnp.abs(masked), axis=-1, keepdims=True), 1e-12)
        edge = masked / denom
        fseg = fn[:, s:e, :]
        aggr = jnp.matmul(jnp.einsum("bij,bjc->bic", edge, fseg, precision=hi),
                          p["w_raw"], precision=hi) + p["b_raw"]
        feat = jnp.matmul(fseg, p["w_feat"], precision=hi) + p["b_feat"]
        cat = jnp.concatenate([feat, aggr, feat - aggr], axis=-1)
        beta = jax.nn.sigmoid(jnp.matmul(cat, p["w_beta"], precision=hi) + p["b_beta"])
        mix = feat * beta + aggr * (1.0 - beta)
        mean = jnp.mean(mix, axis=-1, keepdims=True)
        var = jnp.mean((mix - mean) ** 2, axis=-1, keepdims=True)
        y = (mix - mean) / jnp.sqrt(var + 1e-5) * p["ln_gamma"] + p["ln_beta"]
        outs.append(jnp.maximum(y, 0.0))
    return jnp.concatenate(outs, axis=1)


def init_params(key, in_c, base_c):
    # The PyTorch module's node_beta_layer is Linear(3*in_c, 1) applied to a
    # 3*base_c-wide concat, so the module only runs when in_c == base_c.
    assert in_c == base_c
    params = []
    mkeys = jax.random.split(key, 3)
    for i in range(3):
        k = jax.random.split(mkeys[i], 6)
        s1 = 1.0 / np.sqrt(in_c)
        s2 = 1.0 / np.sqrt(3 * in_c)
        params.append(dict(
            w_feat=jax.random.uniform(k[0], (in_c, base_c), jnp.float32, -s1, s1),
            b_feat=jax.random.uniform(k[1], (base_c,), jnp.float32, -s1, s1),
            w_raw=jax.random.uniform(k[2], (in_c, base_c), jnp.float32, -s1, s1),
            b_raw=jax.random.uniform(k[3], (base_c,), jnp.float32, -s1, s1),
            w_beta=jax.random.uniform(k[4], (3 * in_c, 1), jnp.float32, -s2, s2),
            b_beta=jax.random.uniform(k[5], (1,), jnp.float32, -s2, s2),
            ln_gamma=jnp.ones((base_c,), jnp.float32),
            ln_beta=jnp.zeros((base_c,), jnp.float32),
        ))
    return params


if __name__ == "__main__":
    key = jax.random.PRNGKey(0)
    k1, k2, k3 = jax.random.split(key, 3)

    B, C = 2, 32
    sizes = (8, 13, 27)                      # uneven segments exercise padding + tiling
    N = sum(sizes)

    distribution_edge = jax.random.uniform(k1, (B, N, N), dtype=jnp.float32)
    feature_node = jax.random.normal(k2, (B, N, C), dtype=jnp.float32)
    modal_id = jnp.tile(
        jnp.concatenate([jnp.full((s,), i, jnp.int32) for i, s in enumerate(sizes)])[None],
        (B, 1))
    params = init_params(k3, C, C)

    ref = _d2f_agg_ref(distribution_edge, feature_node, modal_id, params)

    # Default (perf) path: bf16 edge/feature streams, f32 accumulation/epilogue.
    out = d2f_agg(distribution_edge, feature_node, modal_id, params)
    jax.block_until_ready(out)
    assert out.shape == (B, N, C)
    err_bf16 = float(jnp.max(jnp.abs(out - ref)))
    assert err_bf16 < 6e-2, err_bf16

    # Exact path: f32 operands, tight tolerance.
    out32 = d2f_agg(distribution_edge, feature_node, modal_id, params,
                    compute_dtype=jnp.float32)
    jax.block_until_ready(out32)
    assert jnp.allclose(out32, ref, atol=1e-4, rtol=1e-4), \
        float(jnp.max(jnp.abs(out32 - ref)))

    # Force multi-row-tile path (tiny budget) to exercise the in-kernel
    # fn_rows slice and the per-tile diagonal offsets.
    out_tiled = d2f_agg(distribution_edge, feature_node, modal_id, params,
                        compute_dtype=jnp.float32, vmem_budget=4096)
    jax.block_until_ready(out_tiled)
    assert jnp.allclose(out_tiled, ref, atol=1e-4, rtol=1e-4), \
        float(jnp.max(jnp.abs(out_tiled - ref)))

    print("KERNEL_OK")
</pallas_src>

<mosaic_0001>
module attributes {stable_mosaic.version = 11 : i64} {
  func.func @_d2f_agg_kernel(%arg0: i32, %arg1: i32, %arg2: memref<1x8x8xbf16, #tpu.memory_space<vmem>>, %arg3: memref<1x8x32xbf16, #tpu.memory_space<vmem>>, %arg4: memref<32x32xf32, #tpu.memory_space<vmem>>, %arg5: memref<32x32xf32, #tpu.memory_space<vmem>>, %arg6: memref<8x32xf32, #tpu.memory_space<vmem>>, %arg7: memref<1x8x32xf32, #tpu.memory_space<vmem>>) attributes {dimension_semantics = [#tpu.dimension_semantics<parallel>, #tpu.dimension_semantics<parallel>], iteration_bounds = array<i64: 2, 1>, scalar_prefetch = 0 : i64, scratch_operands = 0 : i64, tpu.core_type = #tpu.core_type<tc>, window_params = [{transform_indices = @transform_0, window_bounds = array<i64: 1, 8, 8>}, {transform_indices = @transform_1, window_bounds = array<i64: 1, 8, 32>}, {pipeline_mode = #tpu.pipeline_mode<synchronous>, transform_indices = @transform_2, window_bounds = array<i64: 32, 32>}, {pipeline_mode = #tpu.pipeline_mode<synchronous>, transform_indices = @transform_3, window_bounds = array<i64: 32, 32>}, {pipeline_mode = #tpu.pipeline_mode<synchronous>, transform_indices = @transform_4, window_bounds = array<i64: 8, 32>}, {transform_indices = @transform_5, window_bounds = array<i64: 1, 8, 32>}]} {
    %c0 = arith.constant 0 : index
    %c0_0 = arith.constant 0 : index
    %c0_1 = arith.constant 0 : index
    %0 = vector.load %arg2[%c0, %c0_0, %c0_1] : memref<1x8x8xbf16, #tpu.memory_space<vmem>>, vector<1x8x8xbf16>
    %1 = vector.shape_cast %0 : vector<1x8x8xbf16> to vector<8x8xbf16>
    %c8_i32 = arith.constant 8 : i32
    %2 = arith.muli %arg1, %c8_i32 : i32
    %3 = tpu.iota {dimensions = array<i32: 0>} : vector<8x8xi32>
    %4 = vector.broadcast %2 : i32 to vector<8x8xi32>
    %5 = arith.addi %3, %4 : vector<8x8xi32>
    %6 = tpu.iota {dimensions = array<i32: 1>} : vector<8x8xi32>
    %7 = arith.cmpi eq, %5, %6 : vector<8x8xi32>
    %cst = arith.constant 0.000000e+00 : bf16
    %8 = vector.broadcast %cst : bf16 to vector<8x8xbf16>
    %9 = arith.select %7, %8, %1 : vector<8x8xi1>, vector<8x8xbf16>
    %10 = math.absf %9 : vector<8x8xbf16>
    %11 = arith.extf %10 : vector<8x8xbf16> to vector<8x8xf32>
    %cst_2 = arith.constant dense<0.000000e+00> : vector<8xf32>
    %12 = vector.multi_reduction <add>, %11, %cst_2 [1] : vector<8x8xf32> to vector<8xf32>
    %13 = vector.shape_cast %12 : vector<8xf32> to vector<8x1xf32>
    %cst_3 = arith.constant 9.99999996E-13 : f32
    %14 = vector.broadcast %cst_3 : f32 to vector<8x1xf32>
    %15 = arith.maximumf %13, %14 : vector<8x1xf32>
    %c0_4 = arith.constant 0 : index
    %c0_5 = arith.constant 0 : index
    %c0_6 = arith.constant 0 : index
    %16 = vector.load %arg3[%c0_4, %c0_5, %c0_6] : memref<1x8x32xbf16, #tpu.memory_space<vmem>>, vector<1x8x32xbf16>
    %17 = vector.shape_cast %16 : vector<1x8x32xbf16> to vector<8x32xbf16>
    %18 = tpu.assume_multiple %2, 8 : i32
    %c0_7 = arith.constant 0 : index
    %19 = arith.index_cast %18 : i32 to index
    %c0_8 = arith.constant 0 : index
    %20 = vector.load %arg3[%c0_7, %19, %c0_8] : memref<1x8x32xbf16, #tpu.memory_space<vmem>>, vector<1x8x32xbf16>
    %21 = vector.shape_cast %20 : vector<1x8x32xbf16> to vector<8x32xbf16>
    %c0_9 = arith.constant 0 : index
    %c0_10 = arith.constant 0 : index
    %22 = vector.load %arg4[%c0_9, %c0_10] : memref<32x32xf32, #tpu.memory_space<vmem>>, vector<32x32xf32>
    %c0_11 = arith.constant 0 : index
    %c0_12 = arith.constant 0 : index
    %23 = vector.load %arg5[%c0_11, %c0_12] : memref<32x32xf32, #tpu.memory_space<vmem>>, vector<32x32xf32>
    %c0_13 = arith.constant 0 : index
    %c0_14 = arith.constant 0 : index
    %24 = vector.load %arg6[%c0_13, %c0_14] : memref<8x32xf32, #tpu.memory_space<vmem>>, vector<8x32xf32>
    %25 = vector.extract_strided_slice %24 {offsets = [0, 0], sizes = [1, 32], strides = [1, 1]} : vector<8x32xf32> to vector<1x32xf32>
    %26 = vector.extract_strided_slice %24 {offsets = [1, 0], sizes = [1, 32], strides = [1, 1]} : vector<8x32xf32> to vector<1x32xf32>
    %27 = vector.extract_strided_slice %24 {offsets = [2, 0], sizes = [1, 32], strides = [1, 1]} : vector<8x32xf32> to vector<1x32xf32>
    %28 = vector.extract_strided_slice %24 {offsets = [3, 0], sizes = [1, 32], strides = [1, 1]} : vector<8x32xf32> to vector<1x32xf32>
    %29 = vector.extract_strided_slice %24 {offsets = [4, 0], sizes = [1, 32], strides = [1, 1]} : vector<8x32xf32> to vector<1x32xf32>
    %30 = vector.extract_strided_slice %24 {offsets = [5, 0], sizes = [1, 32], strides = [1, 1]} : vector<8x32xf32> to vector<1x32xf32>
    %31 = vector.extract_strided_slice %24 {offsets = [6, 0], sizes = [1, 1], strides = [1, 1]} : vector<8x32xf32> to vector<1x1xf32>
    %cst_15 = arith.constant dense<0.000000e+00> : vector<8x32xf32>
    %32 = tpu.matmul %9, %17, %cst_15 {dimension_numbers = #tpu.dot_dimension_numbers<[1], [0], [0], [1], [0, 0, 1, 1], [], []>} : vector<8x8xbf16>, vector<8x32xbf16>, vector<8x32xf32> -> vector<8x32xf32>
    %33 = tpu.reciprocal %15 : vector<8x1xf32> -> vector<8x1xf32>
    %34 = vector.broadcast %33 : vector<8x1xf32> to vector<8x32xf32>
    %35 = arith.mulf %32, %34 : vector<8x32xf32>
    %cst_16 = arith.constant dense<0.000000e+00> : vector<8x32xf32>
    %36 = tpu.matmul %35, %23, %cst_16 {dimension_numbers = #tpu.dot_dimension_numbers<[1], [0], [0], [1], [0, 0, 1, 1], [], []>} : vector<8x32xf32>, vector<32x32xf32>, vector<8x32xf32> -> vector<8x32xf32>
    %37 = vector.broadcast %26 : vector<1x32xf32> to vector<8x32xf32>
    %38 = arith.addf %36, %37 : vector<8x32xf32>
    %39 = arith.extf %21 : vector<8x32xbf16> to vector<8x32xf32>
    %cst_17 = arith.constant dense<0.000000e+00> : vector<8x32xf32>
    %40 = tpu.matmul %39, %22, %cst_17 {dimension_numbers = #tpu.dot_dimension_numbers<[1], [0], [0], [1], [0, 0, 1, 1], [], []>} : vector<8x32xf32>, vector<32x32xf32>, vector<8x32xf32> -> vector<8x32xf32>
    %41 = vector.broadcast %25 : vector<1x32xf32> to vector<8x32xf32>
    %42 = arith.addf %40, %41 : vector<8x32xf32>
    %43 = vector.broadcast %27 : vector<1x32xf32> to vector<8x32xf32>
    %44 = arith.mulf %42, %43 : vector<8x32xf32>
    %45 = vector.broadcast %28 : vector<1x32xf32> to vector<8x32xf32>
    %46 = arith.mulf %38, %45 : vector<8x32xf32>
    %47 = arith.addf %44, %46 : vector<8x32xf32>
    %cst_18 = arith.constant dense<0.000000e+00> : vector<8xf32>
    %48 = vector.multi_reduction <add>, %47, %cst_18 [1] : vector<8x32xf32> to vector<8xf32>
    %49 = vector.shape_cast %48 : vector<8xf32> to vector<8x1xf32>
    %50 = vector.broadcast %31 : vector<1x1xf32> to vector<8x1xf32>
    %51 = arith.addf %49, %50 : vector<8x1xf32>
    %52 = arith.negf %51 : vector<8x1xf32>
    %53 = math.exp %52 : vector<8x1xf32>
    %cst_19 = arith.constant 1.000000e+00 : f32
    %54 = vector.broadcast %cst_19 : f32 to vector<8x1xf32>
    %55 = arith.addf %54, %53 : vector<8x1xf32>
    %56 = arith.divf %54, %55 : vector<8x1xf32>
    %57 = vector.broadcast %56 : vector<8x1xf32> to vector<8x32xf32>
    %58 = arith.mulf %42, %57 : vector<8x32xf32>
    %cst_20 = arith.constant 1.000000e+00 : f32
    %59 = vector.broadcast %cst_20 : f32 to vector<8x1xf32>
    %60 = arith.subf %59, %56 : vector<8x1xf32>
    %61 = vector.broadcast %60 : vector<8x1xf32> to vector<8x32xf32>
    %62 = arith.mulf %38, %61 : vector<8x32xf32>
    %63 = arith.addf %58, %62 : vector<8x32xf32>
    %cst_21 = arith.constant dense<0.000000e+00> : vector<8xf32>
    %64 = vector.multi_reduction <add>, %63, %cst_21 [1] : vector<8x32xf32> to vector<8xf32>
    %65 = vector.shape_cast %64 : vector<8xf32> to vector<8x1xf32>
    %cst_22 = arith.constant 3.200000e+01 : f32
    %66 = vector.broadcast %cst_22 : f32 to vector<8x1xf32>
    %67 = arith.divf %65, %66 : vector<8x1xf32>
    %68 = vector.broadcast %67 : vector<8x1xf32> to vector<8x32xf32>
    %69 = arith.subf %63, %68 : vector<8x32xf32>
    %70 = arith.mulf %69, %69 : vector<8x32xf32>
    %cst_23 = arith.constant dense<0.000000e+00> : vector<8xf32>
    %71 = vector.multi_reduction <add>, %70, %cst_23 [1] : vector<8x32xf32> to vector<8xf32>
    %72 = vector.shape_cast %71 : vector<8xf32> to vector<8x1xf32>
    %cst_24 = arith.constant 3.200000e+01 : f32
    %73 = vector.broadcast %cst_24 : f32 to vector<8x1xf32>
    %74 = arith.divf %72, %73 : vector<8x1xf32>
    %cst_25 = arith.constant 9.99999974E-6 : f32
    %75 = vector.broadcast %cst_25 : f32 to vector<8x1xf32>
    %76 = arith.addf %74, %75 : vector<8x1xf32>
    %77 = math.rsqrt %76 : vector<8x1xf32>
    %78 = vector.broadcast %77 : vector<8x1xf32> to vector<8x32xf32>
    %79 = arith.mulf %69, %78 : vector<8x32xf32>
    %80 = vector.broadcast %29 : vector<1x32xf32> to vector<8x32xf32>
    %81 = arith.mulf %79, %80 : vector<8x32xf32>
    %82 = vector.broadcast %30 : vector<1x32xf32> to vector<8x32xf32>
    %83 = arith.addf %81, %82 : vector<8x32xf32>
    %cst_26 = arith.constant 0.000000e+00 : f32
    %84 = vector.broadcast %cst_26 : f32 to vector<8x32xf32>
    %85 = arith.maximumf %83, %84 : vector<8x32xf32>
    %c0_27 = arith.constant 0 : index
    %c0_28 = arith.constant 0 : index
    %c0_29 = arith.constant 0 : index
    %86 = vector.load %arg7[%c0_27, %c0_28, %c0_29] : memref<1x8x32xf32, #tpu.memory_space<vmem>>, vector<1x8x32xf32>
    %87 = vector.shape_cast %86 : vector<1x8x32xf32> to vector<8x32xf32>
    %88 = vector.shape_cast %85 : vector<8x32xf32> to vector<1x8x32xf32>
    tpu.vector_store %arg7[%c0_27, %c0_28, %c0_29], %88 {strides = array<i32>} : memref<1x8x32xf32, #tpu.memory_space<vmem>>, vector<1x8x32xf32>,
    return
  }
  func.func @transform_0(%arg0: i32, %arg1: i32) -> (i32, i32, i32) {
    %c0_i32 = arith.constant 0 : i32
    %c0_i32_0 = arith.constant 0 : i32
    return %arg0, %arg1, %c0_i32 : i32, i32, i32
  }
  func.func @transform_1(%arg0: i32, %arg1: i32) -> (i32, i32, i32) {
    %c0_i32 = arith.constant 0 : i32
    %c0_i32_0 = arith.constant 0 : i32
    %c0_i32_1 = arith.constant 0 : i32
    return %arg0, %c0_i32, %c0_i32_0 : i32, i32, i32
  }
  func.func @transform_2(%arg0: i32, %arg1: i32) -> (i32, i32) {
    %c0_i32 = arith.constant 0 : i32
    %c0_i32_0 = arith.constant 0 : i32
    %c0_i32_1 = arith.constant 0 : i32
    return %c0_i32, %c0_i32_0 : i32, i32
  }
  func.func @transform_3(%arg0: i32, %arg1: i32) -> (i32, i32) {
    %c0_i32 = arith.constant 0 : i32
    %c0_i32_0 = arith.constant 0 : i32
    %c0_i32_1 = arith.constant 0 : i32
    return %c0_i32, %c0_i32_0 : i32, i32
  }
  func.func @transform_4(%arg0: i32, %arg1: i32) -> (i32, i32) {
    %c0_i32 = arith.constant 0 : i32
    %c0_i32_0 = arith.constant 0 : i32
    %c0_i32_1 = arith.constant 0 : i32
    return %c0_i32, %c0_i32_0 : i32, i32
  }
  func.func @transform_5(%arg0: i32, %arg1: i32) -> (i32, i32, i32) {
    %c0_i32 = arith.constant 0 : i32
    %c0_i32_0 = arith.constant 0 : i32
    return %arg0, %arg1, %c0_i32 : i32, i32, i32
  }
}

</mosaic_0001>

<llo_original>
// kernel: tpu_custom_call.1
$region0: #{tpu_custom_call.1}
  #allocation0 [shape = 'u32[]', space=smem, size = 0x4, offset = 0x4, fixed_abs, tag = 'smem constant byte address 0x4 - core index']
  #allocation1 [shape = 'u32[144,128]{1,0:T(1,128)}', space=vmem, size = 0x12000, scoped, tag = 'internal scratch']
  %s0 = inlined_call_operand.hbm [shape: bf16[2,8,8], index: 0, kind: input, shape index: {}]
  %s1 = inlined_call_operand.hbm [shape: bf16[2,8,32], index: 1, kind: input, shape index: {}]
  %s2 = inlined_call_operand.hbm [shape: f32[32,32], index: 2, kind: input, shape index: {}]
  %s3 = inlined_call_operand.hbm [shape: f32[32,32], index: 3, kind: input, shape index: {}]
  %s4 = inlined_call_operand.hbm [shape: f32[8,32], index: 4, kind: input, shape index: {}]
  %s5 = inlined_call_operand.hbm [shape: f32[2,8,32], index: 5, kind: output, shape index: {}]
  %s6 = sld [smem:[#allocation0]]
  $region73: #{tpu_custom_call.1} parent=0
    _
  %s8 = ssub.s32 1, %s6
  %s9 = scalar_select 0, %s8, %s6
  $region1: #{tpu_custom_call.1} parent=0
    #allocation2 [shape = 'u8[4096]{0}', space=vmem, size = 0x1000, scoped, tag = 'input window, operand 0']
    #allocation3 [shape = 's32[2]{0}', space=sflag, size = 0x8, scoped, tag = 'scoped memory for tpu_custom_call.1']
    #allocation4 [shape = 's32[2]{0}', space=sflag, size = 0x8, scoped, tag = 'scoped memory for tpu_custom_call.1']
    #allocation5 [shape = 'u8[4096]{0}', space=vmem, size = 0x1000, scoped, tag = 'input window, operand 1']
    #allocation6 [shape = 's32[2]{0}', space=sflag, size = 0x8, scoped, tag = 'scoped memory for tpu_custom_call.1']
    #allocation7 [shape = 'u8[16384]{0}', space=vmem, size = 0x4000, scoped, tag = 'input window, operand 2, single buffered']
    #allocation8 [shape = 'u8[16384]{0}', space=vmem, size = 0x4000, scoped, tag = 'input window, operand 3, single buffered']
    #allocation9 [shape = 's32[1]{0}', space=sflag, size = 0x4, scoped, tag = 'scoped memory for tpu_custom_call.1']
    #allocation10 [shape = 'u8[4096]{0}', space=vmem, size = 0x1000, scoped, tag = 'input window, operand 4, single buffered']
    #allocation11 [shape = 'u8[8192]{0}', space=vmem, size = 0x2000, scoped, tag = 'output window, operand 0']
    %10 = vsyncpa [#allocation3], 0
    %s11 = scalar_lea.sflag [#allocation3], 1
    %12 = vsyncpa %s11, 0
    %13 = vsyncpa [#allocation6], 0
    %s14 = scalar_lea.sflag [#allocation6], 1
    %15 = vsyncpa %s14, 0
    %16 = vsyncpa [#allocation9], 0
    %17 = vsyncpa [#allocation4], 0
    %s18 = scalar_lea.sflag [#allocation4], 1
    %19 = vsyncpa %s18, 0
    loop: start=0, step=1, limit=4
    $region2: #{tpu_custom_call.1} parent=1 // loop_pre_header
      _
    $region3: #{tpu_custom_call.1} parent=1 // loop_header
      %s21 = sphi 0, %s25
      %p22 = scmp.ge.s32.totalorder %s21, 4
      %s28 = sphi 0, %s40
      %s29 = sphi 0, %s36
      %s30 = sphi 0, %s28
      %s31 = sphi 0, %s29
      %s32 = sphi 0, %s30
      %s33 = sphi 0, %s31
      %s45 = sphi 0, %s47
      %s48 = sphi 0, %s45
      %s49 = sphi 0, %s48
      %s65 = sphi 0, %s49
      %s71 = sphi 0, %s73
      %s74 = sphi 0, %s71
      %s75 = sphi 0, %s74
      %s91 = sphi 0, %s75
      %s95 = sphi 0, %s95
      %s97 = sphi 0, %s95
      %s98 = sphi 0, %s97
      %s112 = sphi 0, %s98
      %s116 = sphi 0, %s116
      %s118 = sphi 0, %s116
      %s119 = sphi 0, %s118
      %s133 = sphi 0, %s119
      %s137 = sphi 0, %s137
      %s139 = sphi 0, %s137
      %s140 = sphi 0, %s139
      %s154 = sphi 0, %s140
      %s162 = sphi 0, %s164
      %s165 = sphi 0, %s162
      %s166 = sphi 0, %s165
      %s182 = sphi 0, %s166
    $region4: #{tpu_custom_call.1} parent=1 // loop_header_branch
      %24 = sbr.rel (%p22) target = $region8
    $region5: #{tpu_custom_call.1} parent=1 // loop_body
      %s26 = ssub.s32 %s21, 1
      %s27 = ssub.s32 %s21, 2
      %s34 = sadd.s32 1, %s29
      %p35 = scmp.ge.s32.totalorder %s34, 1
      %s36 = scalar_select %p35, 0, %s34
      %s37 = sadd.s32 1, %s28
      %s38 = scalar_select %p35, %s37, %s28
      %p39 = scmp.ge.s32.totalorder %s38, 2
      %s40 = scalar_select %p39, 0, %s38
      %s41 = ssub.s32 %s28, %s40
      %s42 = ssub.s32 %s29, %s36
      %s43 = sor.u32 %s41, %s42
      %p44 = scmp.eq.s32.totalorder %s43, 0
      %s46 = sadd.s32 %s45, 1
      %s47 = scalar_select %p44, %s45, %s46
      %p50 = pneg %p44
      %p51 = scmp.eq.s32.totalorder %s21, 1
      %p52 = por %p50, %p51
      %p53 = scmp.ne.s32.totalorder %s45, %s48
      %p54 = scmp.eq.s32.totalorder %s21, 0
      %p55 = por %p53, %p54
      %p56 = scmp.ne.s32.totalorder %s45, %s48
      %p57 = scmp.eq.s32.totalorder %s26, 1
      %p58 = por %p56, %p57
      %p59 = scmp.ne.s32.totalorder %s48, %s49
      %p60 = scmp.eq.s32.totalorder %s26, 0
      %p61 = por %p59, %p60
      %p62 = scmp.ne.s32.totalorder %s48, %s49
      %p63 = scmp.eq.s32.totalorder %s27, 1
      %p64 = por %p62, %p63
      %p66 = scmp.ne.s32.totalorder %s49, %s65
      %p67 = scmp.eq.s32.totalorder %s27, 0
      %p68 = por %p66, %p67
      %s69 = ssub.s32 %s28, %s40
      %p70 = scmp.eq.s32.totalorder %s69, 0
      %s72 = sadd.s32 %s71, 1
      %s73 = scalar_select %p70, %s71, %s72
      %p76 = pneg %p70
      %p77 = scmp.eq.s32.totalorder %s21, 1
      %p78 = por %p76, %p77
      %p79 = scmp.ne.s32.totalorder %s71, %s74
      %p80 = scmp.eq.s32.totalorder %s21, 0
      %p81 = por %p79, %p80
      %p82 = scmp.ne.s32.totalorder %s71, %s74
      %p83 = scmp.eq.s32.totalorder %s26, 1
      %p84 = por %p82, %p83
      %p85 = scmp.ne.s32.totalorder %s74, %s75
      %p86 = scmp.eq.s32.totalorder %s26, 0
      %p87 = por %p85, %p86
      %p88 = scmp.ne.s32.totalorder %s74, %s75
      %p89 = scmp.eq.s32.totalorder %s27, 1
      %p90 = por %p88, %p89
      %p92 = scmp.ne.s32.totalorder %s75, %s91
      %p93 = scmp.eq.s32.totalorder %s27, 0
      %p94 = por %p92, %p93
      %s96 = sadd.s32 %s95, 1
      %p99 = scmp.eq.s32.totalorder %s21, 1
      %p100 = scmp.ne.s32.totalorder %s95, %s97
      %p101 = scmp.eq.s32.totalorder %s21, 0
      %p102 = por %p100, %p101
      %p103 = scmp.ne.s32.totalorder %s95, %s97
      %p104 = scmp.eq.s32.totalorder %s26, 1
      %p105 = por %p103, %p104
      %p106 = scmp.ne.s32.totalorder %s97, %s98
      %p107 = scmp.eq.s32.totalorder %s26, 0
      %p108 = por %p106, %p107
      %p109 = scmp.ne.s32.totalorder %s97, %s98
      %p110 = scmp.eq.s32.totalorder %s27, 1
      %p111 = por %p109, %p110
      %p113 = scmp.ne.s32.totalorder %s98, %s112
      %p114 = scmp.eq.s32.totalorder %s27, 0
      %p115 = por %p113, %p114
      %s117 = sadd.s32 %s116, 1
      %p120 = scmp.eq.s32.totalorder %s21, 1
      %p121 = scmp.ne.s32.totalorder %s116, %s118
      %p122 = scmp.eq.s32.totalorder %s21, 0
      %p123 = por %p121, %p122
      %p124 = scmp.ne.s32.totalorder %s116, %s118
      %p125 = scmp.eq.s32.totalorder %s26, 1
      %p126 = por %p124, %p125
      %p127 = scmp.ne.s32.totalorder %s118, %s119
      %p128 = scmp.eq.s32.totalorder %s26, 0
      %p129 = por %p127, %p128
      %p130 = scmp.ne.s32.totalorder %s118, %s119
      %p131 = scmp.eq.s32.totalorder %s27, 1
      %p132 = por %p130, %p131
      %p134 = scmp.ne.s32.totalorder %s119, %s133
      %p135 = scmp.eq.s32.totalorder %s27, 0
      %p136 = por %p134, %p135
      %s138 = sadd.s32 %s137, 1
      %p141 = scmp.eq.s32.totalorder %s21, 1
      %p142 = scmp.ne.s32.totalorder %s137, %s139
      %p143 = scmp.eq.s32.totalorder %s21, 0
      %p144 = por %p142, %p143
      %p145 = scmp.ne.s32.totalorder %s137, %s139
      %p146 = scmp.eq.s32.totalorder %s26, 1
      %p147 = por %p145, %p146
      %p148 = scmp.ne.s32.totalorder %s139, %s140
      %p149 = scmp.eq.s32.totalorder %s26, 0
      %p150 = por %p148, %p149
      %p151 = scmp.ne.s32.totalorder %s139, %s140
      %p152 = scmp.eq.s32.totalorder %s27, 1
      %p153 = por %p151, %p152
      %p155 = scmp.ne.s32.totalorder %s140, %s154
      %p156 = scmp.eq.s32.totalorder %s27, 0
      %p157 = por %p155, %p156
      %s158 = ssub.s32 %s28, %s40
      %s159 = ssub.s32 %s29, %s36
      %s160 = sor.u32 %s158, %s159
      %p161 = scmp.eq.s32.totalorder %s160, 0
      %s163 = sadd.s32 %s162, 1
      %s164 = scalar_select %p161, %s162, %s163
      %p167 = pneg %p161
      %p168 = scmp.eq.s32.totalorder %s21, 1
      %p169 = por %p167, %p168
      %p170 = scmp.ne.s32.totalorder %s162, %s165
      %p171 = scmp.eq.s32.totalorder %s21, 0
      %p172 = por %p170, %p171
      %p173 = scmp.ne.s32.totalorder %s162, %s165
      %p174 = scmp.eq.s32.totalorder %s26, 1
      %p175 = por %p173, %p174
      %p176 = scmp.ne.s32.totalorder %s165, %s166
      %p177 = scmp.eq.s32.totalorder %s26, 0
      %p178 = por %p176, %p177
      %p179 = scmp.ne.s32.totalorder %s165, %s166
      %p180 = scmp.eq.s32.totalorder %s27, 1
      %p181 = por %p179, %p180
      %p183 = scmp.ne.s32.totalorder %s166, %s182
      %p184 = scmp.eq.s32.totalorder %s27, 0
      %p185 = por %p183, %p184
      %p186 = scmp.le.s32.totalorder 1, %s21
      %p187 = scmp.lt.s32.totalorder %s21, 3
      %p188 = pnand %p186, %p187
      %p189 = pneg %p188
      // Predicated region
      $region9: #{tpu_custom_call.1} parent=5 // pred_check
        _
      $region10: #{tpu_custom_call.1} parent=5 // pred_check_branch
        %191 = sbr.rel (%p188) target = $region12
      $region11: #{tpu_custom_call.1} parent=5 // pred_region
        %s192 = ssub.s32 %s21, 1
        // Predicated region
        $region13: #{tpu_custom_call.1} parent=11 // pred_check
          %p193 = pneg %p108
        $region14: #{tpu_custom_call.1} parent=11 // pred_check_branch
          %195 = sbr.rel (%p193) target = $region16
        $region15: #{tpu_custom_call.1} parent=11 // pred_region
          %s197 = ssub.s32 512, 512
          %198 = vsyncadd [#allocation6], %s197
          %s199 = sshll.u32 [#allocation7], 4
          %s200 = int_to_ptr.vmem [resolvable:$true] %s199
          %205 = dma.hbm_to_vmem [thread:$0]  %s2, 512, %s200, [#allocation6], 128, 128, 8
        $region16: #{tpu_custom_call.1} parent=11 // pred_fallthru
          _
        // Predicated region
        $region17: #{tpu_custom_call.1} parent=11 // pred_check
          %p206 = pneg %p129
        $region18: #{tpu_custom_call.1} parent=11 // pred_check_branch
          %208 = sbr.rel (%p206) target = $region20
        $region19: #{tpu_custom_call.1} parent=11 // pred_region
          %s210 = ssub.s32 512, 512
          %211 = vsyncadd [#allocation9], %s210
          %s212 = sshll.u32 [#allocation8], 4
          %s213 = int_to_ptr.vmem [resolvable:$true] %s212
          %218 = dma.hbm_to_vmem [thread:$0]  %s3, 512, %s213, [#allocation9], 128, 128, 8
        $region20: #{tpu_custom_call.1} parent=11 // pred_fallthru
          _
        // Predicated region
        $region21: #{tpu_custom_call.1} parent=11 // pred_check
          %p219 = pneg %p150
        $region22: #{tpu_custom_call.1} parent=11 // pred_check_branch
          %221 = sbr.rel (%p219) target = $region24
        $region23: #{tpu_custom_call.1} parent=11 // pred_region
          %s223 = ssub.s32 128, 128
          %224 = vsyncadd [#allocation9], %s223
          %s226 = sshll.u32 [#allocation10], 4
          %s227 = int_to_ptr.vmem [resolvable:$true] %s226
          %229 = dma.hbm_to_vmem [thread:$0]  %s4, 128, %s227, [#allocation9]
        $region24: #{tpu_custom_call.1} parent=11 // pred_fallthru
          _
      $region12: #{tpu_custom_call.1} parent=5 // pred_fallthru
        _
      %p230 = scmp.lt.s32.totalorder %s21, 2
      // Predicated region
      $region25: #{tpu_custom_call.1} parent=5 // pred_check
        %p231 = pneg %p230
      $region26: #{tpu_custom_call.1} parent=5 // pred_check_branch
        %233 = sbr.rel (%p231) target = $region28
      $region27: #{tpu_custom_call.1} parent=5 // pred_region
        // Predicated region
        $region29: #{tpu_custom_call.1} parent=27 // pred_check
          %p234 = pneg %p55
        $region30: #{tpu_custom_call.1} parent=27 // pred_check_branch
          %236 = sbr.rel (%p234) target = $region32
        $region31: #{tpu_custom_call.1} parent=27 // pred_region
          %s237 = sand.u32 %s45, 1
          %s238 = scalar_lea.sflag [#allocation3], %s237
          %s239 = sand.u32 %s45, 1
          %s240 = smul.addr %s239, 4
          %s241 = scalar_lea.vmem [#allocation2], %s240
          %s243 = ssub.s32 64, 64
          %244 = vsyncadd %s238, %s243
          %s245 = sadd.s32 %s29, %s28
          %s246 = smul.addr %s245, 64
          %s247 = scalar_lea.hbm %s0, %s246
          %s249 = sshll.u32 %s241, 4
          %s250 = int_to_ptr.vmem [resolvable:$true] %s249
          %252 = dma.hbm_to_vmem [thread:$0]  %s247, 64, %s250, %s238
        $region32: #{tpu_custom_call.1} parent=27 // pred_fallthru
          _
        // Predicated region
        $region33: #{tpu_custom_call.1} parent=27 // pred_check
          %p253 = pneg %p81
        $region34: #{tpu_custom_call.1} parent=27 // pred_check_branch
          %255 = sbr.rel (%p253) target = $region36
        $region35: #{tpu_custom_call.1} parent=27 // pred_region
          %s256 = sand.u32 %s21, 1
          %s257 = scalar_lea.sflag [#allocation6], %s256
          %s258 = sand.u32 %s71, 1
          %s259 = smul.addr %s258, 4
          %s260 = scalar_lea.vmem [#allocation5], %s259
          %s262 = ssub.s32 64, 64
          %263 = vsyncadd %s257, %s262
          %s264 = smul.addr %s28, 64
          %s265 = scalar_lea.hbm %s1, %s264
          %s267 = sshll.u32 %s260, 4
          %s268 = int_to_ptr.vmem [resolvable:$true] %s267
          %270 = dma.hbm_to_vmem [thread:$0]  %s265, 64, %s268, %s257
        $region36: #{tpu_custom_call.1} parent=27 // pred_fallthru
          _
      $region28: #{tpu_custom_call.1} parent=5 // pred_fallthru
        _
      %p271 = scmp.le.s32.totalorder 1, %s21
      %p272 = scmp.lt.s32.totalorder %s21, 3
      %p273 = pnand %p271, %p272
      %p274 = pneg %p273
      // Predicated region
      $region37: #{tpu_custom_call.1} parent=5 // pred_check
        _
      $region38: #{tpu_custom_call.1} parent=5 // pred_check_branch
        %276 = sbr.rel (%p273) target = $region40
      $region39: #{tpu_custom_call.1} parent=5 // pred_region
        %s277 = ssub.s32 %s21, 1
        %s278 = sand.u32 %s48, 1
        %s279 = scalar_lea.sflag [#allocation3], %s278
        %s280 = sand.u32 %s48, 1
        %s281 = smul.addr %s280, 4
        %s282 = scalar_lea.vmem [#allocation2], %s281
        // Predicated region
        $region41: #{tpu_custom_call.1} parent=39 // pred_check
          %p283 = pneg %p61
        $region42: #{tpu_custom_call.1} parent=39 // pred_check_branch
          %285 = sbr.rel (%p283) target = $region44
        $region43: #{tpu_custom_call.1} parent=39 // pred_region
          %286 = dma.done %s279, 64
        $region44: #{tpu_custom_call.1} parent=39 // pred_fallthru
          _
        %s287 = sand.u32 %s26, 1
        %s288 = scalar_lea.sflag [#allocation6], %s287
        %s289 = sand.u32 %s74, 1
        %s290 = smul.addr %s289, 4
        %s291 = scalar_lea.vmem [#allocation5], %s290
        // Predicated region
        $region45: #{tpu_custom_call.1} parent=39 // pred_check
          %p292 = pneg %p87
        $region46: #{tpu_custom_call.1} parent=39 // pred_check_branch
          %294 = sbr.rel (%p292) target = $region48
        $region47: #{tpu_custom_call.1} parent=39 // pred_region
          %295 = dma.done %s288, 64
        $region48: #{tpu_custom_call.1} parent=39 // pred_fallthru
          _
        // Predicated region
        $region49: #{tpu_custom_call.1} parent=39 // pred_check
          %p296 = pneg %p108
        $region50: #{tpu_custom_call.1} parent=39 // pred_check_branch
          %298 = sbr.rel (%p296) target = $region52
        $region51: #{tpu_custom_call.1} parent=39 // pred_region
          %299 = dma.done [#allocation6], 512
        $region52: #{tpu_custom_call.1} parent=39 // pred_fallthru
          _
        // Predicated region
        $region53: #{tpu_custom_call.1} parent=39 // pred_check
          %p300 = pneg %p129
        $region54: #{tpu_custom_call.1} parent=39 // pred_check_branch
          %302 = sbr.rel (%p300) target = $region56
        $region55: #{tpu_custom_call.1} parent=39 // pred_region
          %303 = dma.done [#allocation9], 512
        $region56: #{tpu_custom_call.1} parent=39 // pred_fallthru
          _
        // Predicated region
        $region57: #{tpu_custom_call.1} parent=39 // pred_check
          %p304 = pneg %p150
        $region58: #{tpu_custom_call.1} parent=39 // pred_check_branch
          %306 = sbr.rel (%p304) target = $region60
        $region59: #{tpu_custom_call.1} parent=39 // pred_region
          %307 = dma.done [#allocation9], 128
        $region60: #{tpu_custom_call.1} parent=39 // pred_fallthru
          _
        %s308 = sand.u32 %s48, 1
        %s309 = scalar_lea.sflag [#allocation3], %s308
        %s310 = sand.u32 %s48, 1
        %s311 = smul.addr %s310, 4
        %s312 = scalar_lea.vmem [#allocation2], %s311
        %p313 = pneg %p61
        %p314 = pneg %p58
        %s315 = sand.u32 %s26, 1
        %s316 = scalar_lea.sflag [#allocation6], %s315
        %s317 = sand.u32 %s74, 1
        %s318 = smul.addr %s317, 4
        %s319 = scalar_lea.vmem [#allocation5], %s318
        %p320 = pneg %p87
        %p321 = pneg %p84
        %p322 = pneg %p108
        %p323 = pneg %p105
        %p324 = pneg %p129
        %p325 = pneg %p126
        %p326 = pneg %p150
        %p327 = pneg %p147
        %p328 = pneg %p178
        %p329 = pneg %p175
        %s330 = sand.u32 %s165, 1
        %s331 = scalar_lea.sflag [#allocation4], %s330
        %s332 = sand.u32 %s165, 1
        %s333 = smul.addr %s332, 8
        %s334 = scalar_lea.vmem [#allocation11], %s333
        %v336 = vld [vmem:[%s282] sm:$0xf]
        %s337 = smul.u32 %s31, 8
        %v338 = vlaneseq
        %v339 = vshrl.u32 %v338, 7
        %v340 = vstv %s337
        %v341 = vadd.s32 %v339, %v340
        %v342 = vlaneseq
        %v343 = vand.u32 %v342, 127
        %vm344 = vcmp.eq.s32.totalorder %v341, %v343
        %vm345 = vmpackc.low %vm344, %vm344
        %v346 = vsel %vm345, 0, %v336
        %v347 = vand.u32 2147450879, %v346
        %v348 = vunpack.c.l.bf16 %v347
        %vm349 = vcmask 64512
        %v350 = vsel %vm349, %v348, 0.0
        %351 = vadd.xlane.f32.xlu0 %v350
        %v352 = vpop.xlane.xlu0 %351
        %v353 = vmax.f32 %v352, 1e-12
        %v354 = vld [vmem:[%s291] sm:$0xf]
        %s355 = sshra.s32 %s337, 3
        %s356 = sand.u32 %s337, 7
        %s357 = smul.addr %s355, 4
        %s358 = scalar_lea.vmem %s291, %s357 [#allocation5]
        %v359 = vld [vmem:[%s358] sm:$0xf]
        %v360 = vld [vmem:[#allocation7] sm:$0xff]
        %v361 = vld [vmem:[#allocation7 + $0x8] sm:$0xff]
        %v362 = vld [vmem:[#allocation7 + $0x10] sm:$0xff]
        %v363 = vld [vmem:[#allocation7 + $0x18] sm:$0xff]
        %v364 = vld [vmem:[#allocation8] sm:$0xff]
        %v365 = vld [vmem:[#allocation8 + $0x8] sm:$0xff]
        %v366 = vld [vmem:[#allocation8 + $0x10] sm:$0xff]
        %v367 = vld [vmem:[#allocation8 + $0x18] sm:$0xff]
        %v368 = vld [vmem:[#allocation10] sm:$0xff]
        %v370 = vsel %vm349, %v346, 0
        %vm372 = vcmask 1043456
        %v374 = vsel %vm372, %v354, 0
        %376 = vmatprep.subr.bf16.mxu0 0
        %377 = vmatpush1.bf16.msra.mxu0 0
        %378 = vmatprep.subr.bf16.mxu0 0
        %379 = vmatpush1.bf16.msra.mxu0 0
        %380 = vmatprep.subr.bf16.mxu0 0
        %381 = vmatpush1.bf16.msra.mxu0 0
        %382 = vmatprep.subr.bf16.mxu0 0
        %383 = vmatpush1.bf16.msra.mxu0 0
        %384 = vmatprep.subr.bf16.mxu0 0
        %385 = vmatpush1.bf16.msra.mxu0 0
        %386 = vmatprep.subr.bf16.mxu0 0
        %387 = vmatpush1.bf16.msra.mxu0 0
        %388 = vmatprep.subr.bf16.mxu0 0
        %389 = vmatpush1.bf16.msra.mxu0 0
        %390 = vmatprep.subr.bf16.mxu0 0
        %391 = vmatpush1.bf16.msra.mxu0 %v374
        %392 = vmatprep.subr.bf16.mxu0 0
        %393 = vmatpush2.bf16.msra.mxu0 0
        %394 = vmatprep.subr.bf16.mxu0 0
        %395 = vmatpush2.bf16.msra.mxu0 0
        %396 = vmatprep.subr.bf16.mxu0 0
        %397 = vmatpush2.bf16.msra.mxu0 0
        %398 = vmatprep.subr.bf16.mxu0 0
        %399 = vmatpush2.bf16.msra.mxu0 0
        %400 = vmatprep.subr.bf16.mxu0 0
        %401 = vmatpush2.bf16.msra.mxu0 0
        %402 = vmatprep.subr.bf16.mxu0 0
        %403 = vmatpush2.bf16.msra.mxu0 0
        %404 = vmatprep.subr.bf16.mxu0 0
        %405 = vmatpush2.bf16.msra.mxu0 0
        %406 = vmatprep.subr.bf16.mxu0 0
        %407 = vmatpush2.bf16.msra.mxu0 0
        %408 = vmatprep.mubr.bf16.mxu0 0
        %409 = vmatmul.mubr.bf16.gmra.mxu0 %v370
        %v410 = vpop.f32.mrf.mxu0
        %v411 = vadd.f32 0.0, %v410
        %v412 = vpop.f32.mrf.mxu0
        %v413 = vpop.f32.mrf.mxu0
        %v414 = vpop.f32.mrf.mxu0
        %415 = vdwg.mxu0
        %v416 = vrcp.pop %v353
        %v417 = vmul.f32 %v411, %v416
        %v418 = vlaneseq
        %v419 = vshrl.u32 %v418, 7
        %v420 = vsub.s32 1, %v419
        %v421 = vrot.slane %v368, %v420
        %vm422 = vcmask 261120
        %v424 = vsel %vm422, %v417, 0
        %426 = vmatprep.subr.mxu0 0.0
        %427 = vmatpush1.msra.mxu0 0.0
        %428 = vmatprep.subr.mxu0 0.0
        %429 = vmatpush1.msra.mxu0 0.0
        %430 = vmatprep.subr.mxu0 0.0
        %431 = vmatpush1.msra.mxu0 0.0
        %432 = vmatprep.subr.mxu0 0.0
        %433 = vmatpush1.msra.mxu0 0.0
        %434 = vmatprep.subr.mxu0 0.0
        %435 = vmatpush1.msra.mxu0 0.0
        %436 = vmatprep.subr.mxu0 0.0
        %437 = vmatpush1.msra.mxu0 0.0
        %438 = vmatprep.subr.mxu0 0.0
        %439 = vmatpush1.msra.mxu0 0.0
        %440 = vmatprep.subr.mxu0 0.0
        %441 = vmatpush1.msra.mxu0 0.0
        %442 = vmatprep.subr.mxu0 0.0
        %443 = vmatpush1.msra.mxu0 0.0
        %444 = vmatprep.subr.mxu0 0.0
        %445 = vmatpush1.msra.mxu0 0.0
        %446 = vmatprep.subr.mxu0 0.0
        %447 = vmatpush1.msra.mxu0 0.0
        %448 = vmatprep.subr.mxu0 0.0
        %449 = vmatpush1.msra.mxu0 0.0
        %450 = vmatprep.subr.mxu0 0.0
        %451 = vmatpush1.msra.mxu0 %v367
        %452 = vmatprep.subr.mxu0 0.0
        %453 = vmatpush1.msra.mxu0 %v366
        %454 = vmatprep.subr.mxu0 0.0
        %455 = vmatpush1.msra.mxu0 %v365
        %456 = vmatprep.subr.mxu0 0.0
        %457 = vmatpush1.msra.mxu0 %v364
        %458 = vmatprep.subr.mxu0 0.0
        %459 = vmatpush2.msra.mxu0 0.0
        %460 = vmatprep.subr.mxu0 0.0
        %461 = vmatpush2.msra.mxu0 0.0
        %462 = vmatprep.subr.mxu0 0.0
        %463 = vmatpush2.msra.mxu0 0.0
        %464 = vmatprep.subr.mxu0 0.0
        %465 = vmatpush2.msra.mxu0 0.0
        %466 = vmatprep.subr.mxu0 0.0
        %467 = vmatpush2.msra.mxu0 0.0
        %468 = vmatprep.subr.mxu0 0.0
        %469 = vmatpush2.msra.mxu0 0.0
        %470 = vmatprep.subr.mxu0 0.0
        %471 = vmatpush2.msra.mxu0 0.0
        %472 = vmatprep.subr.mxu0 0.0
        %473 = vmatpush2.msra.mxu0 0.0
        %474 = vmatprep.subr.mxu0 0.0
        %475 = vmatpush2.msra.mxu0 0.0
        %476 = vmatprep.subr.mxu0 0.0
        %477 = vmatpush2.msra.mxu0 0.0
        %478 = vmatprep.subr.mxu0 0.0
        %479 = vmatpush2.msra.mxu0 0.0
        %480 = vmatprep.subr.mxu0 0.0
        %481 = vmatpush2.msra.mxu0 0.0
        %482 = vmatprep.subr.mxu0 0.0
        %483 = vmatpush2.msra.mxu0 0.0
        %484 = vmatprep.subr.mxu0 0.0
        %485 = vmatpush2.msra.mxu0 0.0
        %486 = vmatprep.subr.mxu0 0.0
        %487 = vmatpush2.msra.mxu0 0.0
        %488 = vmatprep.subr.mxu0 0.0
        %489 = vmatpush2.msra.mxu0 0.0
        %490 = vmatprep.mubr.f32.mxu0 0.0
        %491 = vmatmul.mubr.f32.gmra.mxu0 %v424
        %v492 = vpop.f32.mrf.mxu0
        %v493 = vadd.f32 %v421, %v492
        %v494 = vpop.f32.mrf.mxu0
        %495 = vdwg.mxu0
        %v496 = vunpack.c.l.bf16 %v359
        %v497 = vlaneseq
        %v498 = vshrl.u32 %v497, 7
        %v499 = vsub.s32 0, %v498
        %v500 = vrot.slane %v368, %v499
        %v502 = vsel %vm422, %v496, 0
        %504 = vmatprep.subr.mxu0 0.0
        %505 = vmatpush1.msra.mxu0 0.0
        %506 = vmatprep.subr.mxu0 0.0
        %507 = vmatpush1.msra.mxu0 0.0
        %508 = vmatprep.subr.mxu0 0.0
        %509 = vmatpush1.msra.mxu0 0.0
        %510 = vmatprep.subr.mxu0 0.0
        %511 = vmatpush1.msra.mxu0 0.0
        %512 = vmatprep.subr.mxu0 0.0
        %513 = vmatpush1.msra.mxu0 0.0
        %514 = vmatprep.subr.mxu0 0.0
        %515 = vmatpush1.msra.mxu0 0.0
        %516 = vmatprep.subr.mxu0 0.0
        %517 = vmatpush1.msra.mxu0 0.0
        %518 = vmatprep.subr.mxu0 0.0
        %519 = vmatpush1.msra.mxu0 0.0
        %520 = vmatprep.subr.mxu0 0.0
        %521 = vmatpush1.msra.mxu0 0.0
        %522 = vmatprep.subr.mxu0 0.0
        %523 = vmatpush1.msra.mxu0 0.0
        %524 = vmatprep.subr.mxu0 0.0
        %525 = vmatpush1.msra.mxu0 0.0
        %526 = vmatprep.subr.mxu0 0.0
        %527 = vmatpush1.msra.mxu0 0.0
        %528 = vmatprep.subr.mxu0 0.0
        %529 = vmatpush1.msra.mxu0 %v363
        %530 = vmatprep.subr.mxu0 0.0
        %531 = vmatpush1.msra.mxu0 %v362
        %532 = vmatprep.subr.mxu0 0.0
        %533 = vmatpush1.msra.mxu0 %v361
        %534 = vmatprep.subr.mxu0 0.0
        %535 = vmatpush1.msra.mxu0 %v360
        %536 = vmatprep.subr.mxu0 0.0
        %537 = vmatpush2.msra.mxu0 0.0
        %538 = vmatprep.subr.mxu0 0.0
        %539 = vmatpush2.msra.mxu0 0.0
        %540 = vmatprep.subr.mxu0 0.0
        %541 = vmatpush2.msra.mxu0 0.0
        %542 = vmatprep.subr.mxu0 0.0
        %543 = vmatpush2.msra.mxu0 0.0
        %544 = vmatprep.subr.mxu0 0.0
        %545 = vmatpush2.msra.mxu0 0.0
        %546 = vmatprep.subr.mxu0 0.0
        %547 = vmatpush2.msra.mxu0 0.0
        %548 = vmatprep.subr.mxu0 0.0
        %549 = vmatpush2.msra.mxu0 0.0
        %550 = vmatprep.subr.mxu0 0.0
        %551 = vmatpush2.msra.mxu0 0.0
        %552 = vmatprep.subr.mxu0 0.0
        %553 = vmatpush2.msra.mxu0 0.0
        %554 = vmatprep.subr.mxu0 0.0
        %555 = vmatpush2.msra.mxu0 0.0
        %556 = vmatprep.subr.mxu0 0.0
        %557 = vmatpush2.msra.mxu0 0.0
        %558 = vmatprep.subr.mxu0 0.0
        %559 = vmatpush2.msra.mxu0 0.0
        %560 = vmatprep.subr.mxu0 0.0
        %561 = vmatpush2.msra.mxu0 0.0
        %562 = vmatprep.subr.mxu0 0.0
        %563 = vmatpush2.msra.mxu0 0.0
        %564 = vmatprep.subr.mxu0 0.0
        %565 = vmatpush2.msra.mxu0 0.0
        %566 = vmatprep.subr.mxu0 0.0
        %567 = vmatpush2.msra.mxu0 0.0
        %568 = vmatprep.mubr.f32.mxu0 0.0
        %569 = vmatmul.mubr.f32.gmra.mxu0 %v502
        %v570 = vpop.f32.mrf.mxu0
        %v571 = vadd.f32 %v500, %v570
        %v572 = vpop.f32.mrf.mxu0
        %573 = vdwg.mxu0
        %v574 = vlaneseq
        %v575 = vshrl.u32 %v574, 7
        %v576 = vsub.s32 2, %v575
        %v577 = vrot.slane %v368, %v576
        %v578 = vmul.f32 %v571, %v577
        %v579 = vlaneseq
        %v580 = vshrl.u32 %v579, 7
        %v581 = vsub.s32 3, %v580
        %v582 = vrot.slane %v368, %v581
        %v583 = vmul.f32 %v493, %v582
        %v584 = vadd.f32 %v578, %v583
        %v585 = vsel %vm422, %v584, 0.0
        %586 = vadd.xlane.f32.xlu0 %v585
        %v587 = vpop.xlane.xlu0 %586
        %v588 = vlaneseq
        %v589 = vshrl.u32 %v588, 7
        %v590 = vsub.s32 6, %v589
        %v591 = vrot.slane %v368, %v590
        %v592 = vadd.f32 %v587, %v591
        %v593 = vxor.u32 %v592, 2147483648
        %v594 = vmul.f32 %v593, 1.442695
        %v595 = vpow.pop %v594
        %v596 = vadd.f32 %v595, 1.0
        %v597 = vrcp.pop %v596
        %v598 = vmul.f32 1.0, %v597
        %600 = vset.pattern.permute.xlu0 0
        %601 = vperm.xlu0 %600, %v598
        %v602 = vpop.permute.xlu0 %601
        %v604 = vmul.f32 %v571, %v602
        %v605 = vsub.f32 1.0, %v598
        %607 = vset.pattern.permute.xlu0 0
        %608 = vperm.xlu0 %607, %v605
        %v609 = vpop.permute.xlu0 %608
        %v611 = vmul.f32 %v493, %v609
        %v612 = vadd.f32 %v604, %v611
        %v613 = vsel %vm422, %v612, 0.0
        %614 = vadd.xlane.f32.xlu0 %v613
        %v615 = vpop.xlane.xlu0 %614
        %v616 = vrcp.pop 32.0
        %v617 = vmul.f32 %v615, %v616
        %v618 = vsub.f32 %v612, %v617
        %v619 = vmul.f32 %v618, %v618
        %v620 = vsel %vm422, %v619, 0.0
        %621 = vadd.xlane.f32.xlu0 %v620
        %v622 = vpop.xlane.xlu0 %621
        %v623 = vmul.f32 %v622, %v616
        %v624 = vadd.f32 %v623, 1e-05
        %v625 = vrsqrt.pop %v624
        %v626 = vmul.f32 %v618, %v625
        %v627 = vlaneseq
        %v628 = vshrl.u32 %v627, 7
        %v629 = vsub.s32 4, %v628
        %v630 = vrot.slane %v368, %v629
        %v631 = vmul.f32 %v626, %v630
        %v632 = vlaneseq
        %v633 = vshrl.u32 %v632, 7
        %v634 = vsub.s32 5, %v633
        %v635 = vrot.slane %v368, %v634
        %v636 = vadd.f32 %v631, %v635
        %v637 = vmax.f32 %v636, 0.0
        %638 = vst.msk [vmem:[%s334] sm:$0xff] %vm422, %v637
        %s639 = sand.u32 %s165, 1
        %s640 = scalar_lea.sflag [#allocation4], %s639
        %s641 = sand.u32 %s165, 1
        %s642 = smul.addr %s641, 8
        %s643 = scalar_lea.vmem [#allocation11], %s642
        // Predicated region
        $region61: #{tpu_custom_call.1} parent=39 // pred_check
          %p644 = pneg %p175
        $region62: #{tpu_custom_call.1} parent=39 // pred_check_branch
          %646 = sbr.rel (%p644) target = $region64
        $region63: #{tpu_custom_call.1} parent=39 // pred_region
          %s648 = ssub.s32 128, 128
          %649 = vsyncadd %s640, %s648
          %s650 = sadd.s32 %s31, %s30
          %s651 = smul.addr %s650, 128
          %s652 = scalar_lea.hbm %s5, %s651
          %s654 = sshll.u32 %s643, 4
          %s655 = int_to_ptr.vmem [resolvable:$true] %s654
          %657 = dma.vmem_to_hbm [thread:$0]  %s655, 128, %s652, %s640
        $region64: #{tpu_custom_call.1} parent=39 // pred_fallthru
          _
      $region40: #{tpu_custom_call.1} parent=5 // pred_fallthru
        _
      %p658 = scmp.le.s32.totalorder 2, %s21
      // Predicated region
      $region65: #{tpu_custom_call.1} parent=5 // pred_check
        %p659 = pneg %p658
      $region66: #{tpu_custom_call.1} parent=5 // pred_check_branch
        %661 = sbr.rel (%p659) target = $region68
      $region67: #{tpu_custom_call.1} parent=5 // pred_region
        %s662 = ssub.s32 %s21, 2
        // Predicated region
        $region69: #{tpu_custom_call.1} parent=67 // pred_check
          %p663 = pneg %p181
        $region70: #{tpu_custom_call.1} parent=67 // pred_check_branch
          %665 = sbr.rel (%p663) target = $region72
        $region71: #{tpu_custom_call.1} parent=67 // pred_region
          %s666 = sand.u32 %s166, 1
          %s667 = scalar_lea.sflag [#allocation4], %s666
          %s668 = sand.u32 %s166, 1
          %s669 = smul.addr %s668, 8
          %s670 = scalar_lea.vmem [#allocation11], %s669
          %671 = dma.done %s667, 128
        $region72: #{tpu_custom_call.1} parent=67 // pred_fallthru
          _
      $region68: #{tpu_custom_call.1} parent=5 // pred_fallthru
        _
    $region6: #{tpu_custom_call.1} parent=1 // loop_footer
      %s25 = sadd.s32 1, %s21
    $region7: #{tpu_custom_call.1} parent=1 // loop_footer_branch
      %20 = sbr.rel target = $region3
    $region8: #{tpu_custom_call.1} parent=1 // loop_exit
      _
    %672 = vsyncpa [#allocation3], 1
    %s673 = scalar_lea.sflag [#allocation3], 1
    %674 = vsyncpa %s673, 1
    %675 = vsyncpa [#allocation6], 1
    %s676 = scalar_lea.sflag [#allocation6], 1
    %677 = vsyncpa %s676, 1
    %678 = vsyncpa [#allocation9], 1
    %679 = vsyncpa [#allocation4], 1
    %s680 = scalar_lea.sflag [#allocation4], 1
    %681 = vsyncpa %s680, 1

</llo_original>
